<compile_context>
chip_gen: v5e
topology: v5e:2x2
jax: 0.10.0
libtpu: 0.0.40
codegen_flags: <defaults>
</compile_context>

<pallas_src>
import functools
from math import sqrt

import jax
import jax.numpy as jnp
from jax import lax
from jax.experimental import pallas as pl
from jax.experimental.pallas import tpu as pltpu

LN_EPS = 1e-5


def _layer_norm_relu(h, gamma, beta):
    """One-pass f32 LayerNorm (biased var, eps inside rsqrt) followed by ReLU.

    var = E[h^2] - mu^2 keeps the two cross-lane reductions independent so they
    overlap in the XLU slot; numerically safe in f32 for post-matmul values.
    """
    n_inv = 1.0 / h.shape[-1]
    s1 = jnp.sum(h, axis=-1, keepdims=True)
    s2 = jnp.sum(h * h, axis=-1, keepdims=True)
    mu = s1 * n_inv
    var = s2 * n_inv - mu * mu
    hn = (h - mu) * lax.rsqrt(var + LN_EPS)
    return jnp.maximum(hn * gamma + beta, 0.0)


def critic_kernel(x_ref, w1_ref, w2_ref, w3_ref, sp_ref, ln_ref, out_ref,
                  *, num_local, hidden_dim, matmul_dtype, packed_w1):
    """One grid step = `num_local` (<=2) critics on one B-tile.

    x_ref  : [TB, Din]                 input tile (varies with B axis)
    w1_ref : [Din, k*H]  (packed)  or  [k, Din, H]  (unpacked, H % 128 != 0)
    w2_ref : [k, H, H]
    w3_ref : [k, H, H]
    sp_ref : [k, 5, H]   rows: b1, b2, b3, w4 (column as row), b4 (broadcast)
    ln_ref : [6, H]      rows: g1, be1, g2, be2, g3, be3 (shared across ensemble)
    out_ref: [1, k, TB]  lane-dense output tile
    """
    H = hidden_dim
    x = x_ref[...]

    if packed_w1:
        # ONE wide matmul over all local critics (shared x, lane-dense N dim).
        h_all = jnp.dot(x, w1_ref[...], preferred_element_type=jnp.float32)

    g1, be1 = ln_ref[0:1, :], ln_ref[1:2, :]
    g2, be2 = ln_ref[2:3, :], ln_ref[3:4, :]
    g3, be3 = ln_ref[4:5, :], ln_ref[5:6, :]

    q_rows = []
    for i in range(num_local):                 # k <= 2: static unroll is safe
        spi = sp_ref[i]                        # [5, H] f32
        b1, b2, b3 = spi[0:1, :], spi[1:2, :], spi[2:3, :]
        w4_row = spi[3:4, :]                   # [1, H]
        b4 = spi[4:5, 0:1]                     # [1, 1]

        if packed_w1:
            h1 = h_all[:, i * H:(i + 1) * H]   # lane-aligned (H % 128 == 0)
        else:
            h1 = jnp.dot(x, w1_ref[i], preferred_element_type=jnp.float32)

        # Bias is added BEFORE LayerNorm (cannot be folded into LN beta).
        h = _layer_norm_relu(h1 + b1, g1, be1)

        h = jnp.dot(h.astype(matmul_dtype), w2_ref[i],
                    preferred_element_type=jnp.float32) + b2
        h = _layer_norm_relu(h, g2, be2)

        h = jnp.dot(h.astype(matmul_dtype), w3_ref[i],
                    preferred_element_type=jnp.float32) + b3
        h = _layer_norm_relu(h, g3, be3)

        # Final EnsembledLinear(H, 1): contract over H with the output landing
        # on lanes ([1, TB]) so the store is lane-dense (kept in f32).
        q_row = lax.dot_general(w4_row, h, (((1,), (1,)), ((), ())),
                                preferred_element_type=jnp.float32) + b4
        q_rows.append(q_row)                   # [1, TB]

    qs = jnp.concatenate(q_rows, axis=0)       # [k, TB]
    out_ref[...] = qs[None].astype(out_ref.dtype)


def ensembled_critic_forward(state, action, params,
                             *, matmul_dtype=jnp.bfloat16):
    """state: [B, S], action: [B, A]  ->  q_values: [E, B]."""
    (w1, b1, g1, be1, w2, b2, g2, be2, w3, b3, g3, be3, w4, b4) = params
    E, Din, H = w1.shape
    B = state.shape[0]

    # Shared input: concat once; do NOT materialize the ensemble broadcast.
    x = jnp.concatenate([state, action], axis=-1).astype(matmul_dtype)  # [B, Din]

    # Critics per grid step (finer grid pipelines weight DMA behind compute).
    k = 2 if E % 2 == 0 else 1
    n_g = E // k

    # Layer-1 packing only when per-critic column blocks stay lane-aligned.
    packed_w1 = (H % 128 == 0)
    if packed_w1:
        w1k = jnp.transpose(w1, (1, 0, 2)).reshape(Din, E * H).astype(matmul_dtype)
    else:
        w1k = w1.astype(matmul_dtype)                       # [E, Din, H]
    w2c = w2.astype(matmul_dtype)
    w3c = w3.astype(matmul_dtype)

    # Pack small per-critic params (f32): rows = b1, b2, b3, w4, b4.
    sp = jnp.concatenate(
        [b1, b2, b3,
         jnp.transpose(w4, (0, 2, 1)),                      # [E, 1, H]
         jnp.broadcast_to(b4, (E, 1, H))],                  # [E, 1, H]
        axis=1).astype(jnp.float32)                         # [E, 5, H]

    # Shared LayerNorm params (one LN per layer, shared across the ensemble).
    ln = jnp.concatenate(
        [g1.reshape(1, H), be1.reshape(1, H),
         g2.reshape(1, H), be2.reshape(1, H),
         g3.reshape(1, H), be3.reshape(1, H)],
        axis=0).astype(jnp.float32)                         # [6, H]

    # --- generation-aware VMEM budget -------------------------------------
    try:
        phys_vmem = int(pltpu.get_tpu_info().vmem_capacity_bytes)
    except Exception:
        phys_vmem = 128 * 2 ** 20
    ceiling = phys_vmem * 3 // 4          # ~25% headroom: ≈48 MiB v7x, ≈96 MiB v5e/v6e

    msz = jnp.dtype(matmul_dtype).itemsize

    def vmem_estimate(tb):
        blocks = (tb * Din * msz                       # x tile
                  + Din * k * H * msz                  # layer-1 weight block
                  + 2 * k * H * H * msz                # W2 + W3 blocks
                  + k * 5 * H * 4 + 6 * H * 4          # packed biases + LN params
                  + k * tb * 4)                        # output block
        interm = (tb * k * H * 4                       # f32 h_all / h1
                  + 3 * tb * H * 4                     # per-critic f32 temporaries
                  + 2 * tb * H * msz)                  # matmul-dtype casts
        return 2 * blocks + interm                     # 2x = double-buffered pipeline

    # --- B tiling (TB multiple of 128 when more than one tile) ------------
    B8 = -(-B // 8) * 8
    if B8 <= 512:
        tb = B8
    else:
        tb = 512
        while tb > 128 and vmem_estimate(tb) > ceiling:
            tb //= 2
    B_pad = -(-B8 // tb) * tb
    n_b = B_pad // tb
    if B_pad != B:
        x = jnp.pad(x, ((0, B_pad - B), (0, 0)))       # zero rows; sliced off below

    vmem_limit = int(min(ceiling, max(32 * 2 ** 20, int(1.25 * vmem_estimate(tb)))))

    kernel = functools.partial(critic_kernel, num_local=k, hidden_dim=H,
                               matmul_dtype=matmul_dtype, packed_w1=packed_w1)

    if packed_w1:
        w1_spec = pl.BlockSpec((Din, k * H), lambda g, b: (0, g))
    else:
        w1_spec = pl.BlockSpec((k, Din, H), lambda g, b: (g, 0, 0))

    # Grid: (critic-step, B-tile); B innermost so weights stay resident across
    # B-tiles (constant index_maps along b).  Both axes are independent.
    out = pl.pallas_call(
        kernel,
        out_shape=jax.ShapeDtypeStruct((n_g, k, B_pad), jnp.float32),
        grid_spec=pltpu.PrefetchScalarGridSpec(
            num_scalar_prefetch=0,
            grid=(n_g, n_b),
            in_specs=[
                pl.BlockSpec((tb, Din), lambda g, b: (b, 0)),      # x tile
                w1_spec,                                           # layer-1 weights
                pl.BlockSpec((k, H, H), lambda g, b: (g, 0, 0)),   # W2
                pl.BlockSpec((k, H, H), lambda g, b: (g, 0, 0)),   # W3
                pl.BlockSpec((k, 5, H), lambda g, b: (g, 0, 0)),   # packed biases/W4
                pl.BlockSpec((6, H), lambda g, b: (0, 0)),         # LN params (resident)
            ],
            out_specs=pl.BlockSpec((1, k, tb), lambda g, b: (g, 0, b)),
        ),
        compiler_params=pltpu.CompilerParams(
            dimension_semantics=("parallel", "parallel"),
            vmem_limit_bytes=vmem_limit),
    )(x, w1k, w2c, w3c, sp, ln)

    return out.reshape(E, B_pad)[:, :B]


def init_params(key, state_dim, action_dim, hidden_dim, num_critics):
    """Deterministic init mirroring EnsembledCritic.__init__ (edac_init=True)."""
    Din = state_dim + action_dim
    E, H = num_critics, hidden_dim
    ks = jax.random.split(key, 8)

    def kaiming_uniform(k, fan_in, shape):
        bound = 1.0 / sqrt(fan_in)           # kaiming_uniform_ with a=sqrt(5)
        return jax.random.uniform(k, shape, jnp.float32, -bound, bound)

    w1 = kaiming_uniform(ks[0], Din, (E, Din, H))
    w2 = kaiming_uniform(ks[1], H, (E, H, H))
    w3 = kaiming_uniform(ks[2], H, (E, H, H))
    b1 = jnp.full((E, 1, H), 0.1, jnp.float32)   # edac_init: bias = 0.1
    b2 = jnp.full((E, 1, H), 0.1, jnp.float32)
    b3 = jnp.full((E, 1, H), 0.1, jnp.float32)
    w4 = jax.random.uniform(ks[3], (E, H, 1), jnp.float32, -0.003, 0.003)
    b4 = jax.random.uniform(ks[4], (E, 1, 1), jnp.float32, -0.003, 0.003)
    ones = jnp.ones((1, H), jnp.float32)
    zeros = jnp.zeros((1, H), jnp.float32)
    return (w1, b1, ones, zeros,
            w2, b2, ones, zeros,
            w3, b3, ones, zeros,
            w4, b4)


def reference_forward(state, action, params):
    """Pure-JAX f32 reference matching the PyTorch module."""
    (w1, b1, g1, be1, w2, b2, g2, be2, w3, b3, g3, be3, w4, b4) = params
    E = w1.shape[0]
    x = jnp.concatenate([state, action], axis=-1)[None]
    x = jnp.broadcast_to(x, (E,) + x.shape[1:]).astype(jnp.float32)

    def ln(h, g, b):
        mu = jnp.mean(h, -1, keepdims=True)
        var = jnp.mean((h - mu) ** 2, -1, keepdims=True)
        return (h - mu) * lax.rsqrt(var + LN_EPS) * g + b

    h = jax.nn.relu(ln(jnp.einsum("ebi,eio->ebo", x, w1) + b1, g1, be1))
    h = jax.nn.relu(ln(jnp.einsum("ebi,eio->ebo", h, w2) + b2, g2, be2))
    h = jax.nn.relu(ln(jnp.einsum("ebi,eio->ebo", h, w3) + b3, g3, be3))
    q = jnp.einsum("ebi,eio->ebo", h, w4) + b4
    return q[..., 0]


def _run_and_check(B, state_dim, action_dim, hidden_dim, num_critics, seed):
    key = jax.random.PRNGKey(seed)
    k_s, k_a, k_p = jax.random.split(key, 3)
    state = jax.random.normal(k_s, (B, state_dim), jnp.float32)
    action = jax.random.normal(k_a, (B, action_dim), jnp.float32)
    params = init_params(k_p, state_dim, action_dim, hidden_dim, num_critics)

    q_ref = reference_forward(state, action, params)

    # Exact-precision path (f32 matmuls): must match the f32 reference tightly.
    q32 = jax.block_until_ready(
        ensembled_critic_forward(state, action, params, matmul_dtype=jnp.float32))
    assert q32.shape == (num_critics, B)
    assert jnp.allclose(q32, q_ref, atol=1e-4, rtol=1e-4), (q32, q_ref)

    # Performance path (bf16 MXU operands, f32 accumulation / LN).
    q16 = jax.block_until_ready(
        ensembled_critic_forward(state, action, params, matmul_dtype=jnp.bfloat16))
    assert q16.shape == (num_critics, B)
    assert jnp.allclose(q16, q_ref, atol=2e-2, rtol=2e-1), (q16, q_ref)


if __name__ == "__main__":
    # Small config: single grid step, unpacked layer-1 path (H % 128 != 0).
    _run_and_check(B=8, state_dim=12, action_dim=4,
                   hidden_dim=32, num_critics=2, seed=0)
    # Packed lane-aligned layer-1 path, 2 critic steps (grid axis 0).
    _run_and_check(B=16, state_dim=17, action_dim=6,
                   hidden_dim=128, num_critics=4, seed=0)
    # Exercises the B-tiling path (2 B-tiles with zero-padding + unpad).
    _run_and_check(B=640, state_dim=17, action_dim=6,
                   hidden_dim=128, num_critics=2, seed=0)

    print("KERNEL_OK")
</pallas_src>

<mosaic_0001>
module attributes {stable_mosaic.version = 11 : i64} {
  func.func @critic_kernel(%arg0: i32, %arg1: i32, %arg2: memref<8x16xf32, #tpu.memory_space<vmem>>, %arg3: memref<2x16x32xf32, #tpu.memory_space<vmem>>, %arg4: memref<2x32x32xf32, #tpu.memory_space<vmem>>, %arg5: memref<2x32x32xf32, #tpu.memory_space<vmem>>, %arg6: memref<2x5x32xf32, #tpu.memory_space<vmem>>, %arg7: memref<6x32xf32, #tpu.memory_space<vmem>>, %arg8: memref<1x2x8xf32, #tpu.memory_space<vmem>>) attributes {dimension_semantics = [#tpu.dimension_semantics<parallel>, #tpu.dimension_semantics<parallel>], iteration_bounds = array<i64: 1, 1>, scalar_prefetch = 0 : i64, scratch_operands = 0 : i64, tpu.core_type = #tpu.core_type<tc>, window_params = [{transform_indices = @transform_0, window_bounds = array<i64: 8, 16>}, {transform_indices = @transform_1, window_bounds = array<i64: 2, 16, 32>}, {transform_indices = @transform_2, window_bounds = array<i64: 2, 32, 32>}, {transform_indices = @transform_3, window_bounds = array<i64: 2, 32, 32>}, {transform_indices = @transform_4, window_bounds = array<i64: 2, 5, 32>}, {pipeline_mode = #tpu.pipeline_mode<synchronous>, transform_indices = @transform_5, window_bounds = array<i64: 6, 32>}, {transform_indices = @transform_6, window_bounds = array<i64: 1, 2, 8>}]} {
    %c0 = arith.constant 0 : index
    %c0_0 = arith.constant 0 : index
    %0 = vector.load %arg2[%c0, %c0_0] : memref<8x16xf32, #tpu.memory_space<vmem>>, vector<8x16xf32>
    %c0_1 = arith.constant 0 : index
    %c0_2 = arith.constant 0 : index
    %1 = vector.load %arg7[%c0_1, %c0_2] : memref<6x32xf32, #tpu.memory_space<vmem>>, vector<1x32xf32>
    %c1 = arith.constant 1 : index
    %c0_3 = arith.constant 0 : index
    %2 = vector.load %arg7[%c1, %c0_3] : memref<6x32xf32, #tpu.memory_space<vmem>>, vector<1x32xf32>
    %c2 = arith.constant 2 : index
    %c0_4 = arith.constant 0 : index
    %3 = vector.load %arg7[%c2, %c0_4] : memref<6x32xf32, #tpu.memory_space<vmem>>, vector<1x32xf32>
    %c3 = arith.constant 3 : index
    %c0_5 = arith.constant 0 : index
    %4 = vector.load %arg7[%c3, %c0_5] : memref<6x32xf32, #tpu.memory_space<vmem>>, vector<1x32xf32>
    %c4 = arith.constant 4 : index
    %c0_6 = arith.constant 0 : index
    %5 = vector.load %arg7[%c4, %c0_6] : memref<6x32xf32, #tpu.memory_space<vmem>>, vector<1x32xf32>
    %c5 = arith.constant 5 : index
    %c0_7 = arith.constant 0 : index
    %6 = vector.load %arg7[%c5, %c0_7] : memref<6x32xf32, #tpu.memory_space<vmem>>, vector<1x32xf32>
    %c0_8 = arith.constant 0 : index
    %c0_9 = arith.constant 0 : index
    %c0_10 = arith.constant 0 : index
    %7 = vector.load %arg6[%c0_8, %c0_9, %c0_10] : memref<2x5x32xf32, #tpu.memory_space<vmem>>, vector<1x5x32xf32>
    %8 = vector.shape_cast %7 : vector<1x5x32xf32> to vector<5x32xf32>
    %9 = vector.extract_strided_slice %8 {offsets = [0, 0], sizes = [1, 32], strides = [1, 1]} : vector<5x32xf32> to vector<1x32xf32>
    %10 = vector.extract_strided_slice %8 {offsets = [1, 0], sizes = [1, 32], strides = [1, 1]} : vector<5x32xf32> to vector<1x32xf32>
    %11 = vector.extract_strided_slice %8 {offsets = [2, 0], sizes = [1, 32], strides = [1, 1]} : vector<5x32xf32> to vector<1x32xf32>
    %12 = vector.extract_strided_slice %8 {offsets = [3, 0], sizes = [1, 32], strides = [1, 1]} : vector<5x32xf32> to vector<1x32xf32>
    %13 = vector.extract_strided_slice %8 {offsets = [4, 0], sizes = [1, 1], strides = [1, 1]} : vector<5x32xf32> to vector<1x1xf32>
    %c0_11 = arith.constant 0 : index
    %c0_12 = arith.constant 0 : index
    %c0_13 = arith.constant 0 : index
    %14 = vector.load %arg3[%c0_11, %c0_12, %c0_13] : memref<2x16x32xf32, #tpu.memory_space<vmem>>, vector<1x16x32xf32>
    %15 = vector.shape_cast %14 : vector<1x16x32xf32> to vector<16x32xf32>
    %cst = arith.constant dense<0.000000e+00> : vector<8x32xf32>
    %16 = tpu.matmul %0, %15, %cst {dimension_numbers = #tpu.dot_dimension_numbers<[1], [0], [0], [1], [0, 0, 1, 1], [], []>} : vector<8x16xf32>, vector<16x32xf32>, vector<8x32xf32> -> vector<8x32xf32>
    %17 = vector.broadcast %9 : vector<1x32xf32> to vector<8x32xf32>
    %18 = arith.addf %16, %17 : vector<8x32xf32>
    %cst_14 = arith.constant dense<0.000000e+00> : vector<8xf32>
    %19 = vector.multi_reduction <add>, %18, %cst_14 [1] : vector<8x32xf32> to vector<8xf32>
    %20 = vector.shape_cast %19 : vector<8xf32> to vector<8x1xf32>
    %21 = arith.mulf %18, %18 : vector<8x32xf32>
    %cst_15 = arith.constant dense<0.000000e+00> : vector<8xf32>
    %22 = vector.multi_reduction <add>, %21, %cst_15 [1] : vector<8x32xf32> to vector<8xf32>
    %23 = vector.shape_cast %22 : vector<8xf32> to vector<8x1xf32>
    %cst_16 = arith.constant 3.125000e-02 : f32
    %24 = vector.broadcast %cst_16 : f32 to vector<8x1xf32>
    %25 = arith.mulf %20, %24 : vector<8x1xf32>
    %cst_17 = arith.constant 3.125000e-02 : f32
    %26 = vector.broadcast %cst_17 : f32 to vector<8x1xf32>
    %27 = arith.mulf %23, %26 : vector<8x1xf32>
    %28 = arith.mulf %25, %25 : vector<8x1xf32>
    %29 = arith.subf %27, %28 : vector<8x1xf32>
    %30 = vector.broadcast %25 : vector<8x1xf32> to vector<8x32xf32>
    %31 = arith.subf %18, %30 : vector<8x32xf32>
    %cst_18 = arith.constant 9.99999974E-6 : f32
    %32 = vector.broadcast %cst_18 : f32 to vector<8x1xf32>
    %33 = arith.addf %29, %32 : vector<8x1xf32>
    %34 = math.rsqrt %33 : vector<8x1xf32>
    %35 = vector.broadcast %34 : vector<8x1xf32> to vector<8x32xf32>
    %36 = arith.mulf %31, %35 : vector<8x32xf32>
    %37 = vector.broadcast %1 : vector<1x32xf32> to vector<8x32xf32>
    %38 = arith.mulf %36, %37 : vector<8x32xf32>
    %39 = vector.broadcast %2 : vector<1x32xf32> to vector<8x32xf32>
    %40 = arith.addf %38, %39 : vector<8x32xf32>
    %cst_19 = arith.constant 0.000000e+00 : f32
    %41 = vector.broadcast %cst_19 : f32 to vector<8x32xf32>
    %42 = arith.maximumf %40, %41 : vector<8x32xf32>
    %c0_20 = arith.constant 0 : index
    %c0_21 = arith.constant 0 : index
    %c0_22 = arith.constant 0 : index
    %43 = vector.load %arg4[%c0_20, %c0_21, %c0_22] : memref<2x32x32xf32, #tpu.memory_space<vmem>>, vector<1x32x32xf32>
    %44 = vector.shape_cast %43 : vector<1x32x32xf32> to vector<32x32xf32>
    %cst_23 = arith.constant dense<0.000000e+00> : vector<8x32xf32>
    %45 = tpu.matmul %42, %44, %cst_23 {dimension_numbers = #tpu.dot_dimension_numbers<[1], [0], [0], [1], [0, 0, 1, 1], [], []>} : vector<8x32xf32>, vector<32x32xf32>, vector<8x32xf32> -> vector<8x32xf32>
    %46 = vector.broadcast %10 : vector<1x32xf32> to vector<8x32xf32>
    %47 = arith.addf %45, %46 : vector<8x32xf32>
    %cst_24 = arith.constant dense<0.000000e+00> : vector<8xf32>
    %48 = vector.multi_reduction <add>, %47, %cst_24 [1] : vector<8x32xf32> to vector<8xf32>
    %49 = vector.shape_cast %48 : vector<8xf32> to vector<8x1xf32>
    %50 = arith.mulf %47, %47 : vector<8x32xf32>
    %cst_25 = arith.constant dense<0.000000e+00> : vector<8xf32>
    %51 = vector.multi_reduction <add>, %50, %cst_25 [1] : vector<8x32xf32> to vector<8xf32>
    %52 = vector.shape_cast %51 : vector<8xf32> to vector<8x1xf32>
    %cst_26 = arith.constant 3.125000e-02 : f32
    %53 = vector.broadcast %cst_26 : f32 to vector<8x1xf32>
    %54 = arith.mulf %49, %53 : vector<8x1xf32>
    %cst_27 = arith.constant 3.125000e-02 : f32
    %55 = vector.broadcast %cst_27 : f32 to vector<8x1xf32>
    %56 = arith.mulf %52, %55 : vector<8x1xf32>
    %57 = arith.mulf %54, %54 : vector<8x1xf32>
    %58 = arith.subf %56, %57 : vector<8x1xf32>
    %59 = vector.broadcast %54 : vector<8x1xf32> to vector<8x32xf32>
    %60 = arith.subf %47, %59 : vector<8x32xf32>
    %cst_28 = arith.constant 9.99999974E-6 : f32
    %61 = vector.broadcast %cst_28 : f32 to vector<8x1xf32>
    %62 = arith.addf %58, %61 : vector<8x1xf32>
    %63 = math.rsqrt %62 : vector<8x1xf32>
    %64 = vector.broadcast %63 : vector<8x1xf32> to vector<8x32xf32>
    %65 = arith.mulf %60, %64 : vector<8x32xf32>
    %66 = vector.broadcast %3 : vector<1x32xf32> to vector<8x32xf32>
    %67 = arith.mulf %65, %66 : vector<8x32xf32>
    %68 = vector.broadcast %4 : vector<1x32xf32> to vector<8x32xf32>
    %69 = arith.addf %67, %68 : vector<8x32xf32>
    %cst_29 = arith.constant 0.000000e+00 : f32
    %70 = vector.broadcast %cst_29 : f32 to vector<8x32xf32>
    %71 = arith.maximumf %69, %70 : vector<8x32xf32>
    %c0_30 = arith.constant 0 : index
    %c0_31 = arith.constant 0 : index
    %c0_32 = arith.constant 0 : index
    %72 = vector.load %arg5[%c0_30, %c0_31, %c0_32] : memref<2x32x32xf32, #tpu.memory_space<vmem>>, vector<1x32x32xf32>
    %73 = vector.shape_cast %72 : vector<1x32x32xf32> to vector<32x32xf32>
    %cst_33 = arith.constant dense<0.000000e+00> : vector<8x32xf32>
    %74 = tpu.matmul %71, %73, %cst_33 {dimension_numbers = #tpu.dot_dimension_numbers<[1], [0], [0], [1], [0, 0, 1, 1], [], []>} : vector<8x32xf32>, vector<32x32xf32>, vector<8x32xf32> -> vector<8x32xf32>
    %75 = vector.broadcast %11 : vector<1x32xf32> to vector<8x32xf32>
    %76 = arith.addf %74, %75 : vector<8x32xf32>
    %cst_34 = arith.constant dense<0.000000e+00> : vector<8xf32>
    %77 = vector.multi_reduction <add>, %76, %cst_34 [1] : vector<8x32xf32> to vector<8xf32>
    %78 = vector.shape_cast %77 : vector<8xf32> to vector<8x1xf32>
    %79 = arith.mulf %76, %76 : vector<8x32xf32>
    %cst_35 = arith.constant dense<0.000000e+00> : vector<8xf32>
    %80 = vector.multi_reduction <add>, %79, %cst_35 [1] : vector<8x32xf32> to vector<8xf32>
    %81 = vector.shape_cast %80 : vector<8xf32> to vector<8x1xf32>
    %cst_36 = arith.constant 3.125000e-02 : f32
    %82 = vector.broadcast %cst_36 : f32 to vector<8x1xf32>
    %83 = arith.mulf %78, %82 : vector<8x1xf32>
    %cst_37 = arith.constant 3.125000e-02 : f32
    %84 = vector.broadcast %cst_37 : f32 to vector<8x1xf32>
    %85 = arith.mulf %81, %84 : vector<8x1xf32>
    %86 = arith.mulf %83, %83 : vector<8x1xf32>
    %87 = arith.subf %85, %86 : vector<8x1xf32>
    %88 = vector.broadcast %83 : vector<8x1xf32> to vector<8x32xf32>
    %89 = arith.subf %76, %88 : vector<8x32xf32>
    %cst_38 = arith.constant 9.99999974E-6 : f32
    %90 = vector.broadcast %cst_38 : f32 to vector<8x1xf32>
    %91 = arith.addf %87, %90 : vector<8x1xf32>
    %92 = math.rsqrt %91 : vector<8x1xf32>
    %93 = vector.broadcast %92 : vector<8x1xf32> to vector<8x32xf32>
    %94 = arith.mulf %89, %93 : vector<8x32xf32>
    %95 = vector.broadcast %5 : vector<1x32xf32> to vector<8x32xf32>
    %96 = arith.mulf %94, %95 : vector<8x32xf32>
    %97 = vector.broadcast %6 : vector<1x32xf32> to vector<8x32xf32>
    %98 = arith.addf %96, %97 : vector<8x32xf32>
    %cst_39 = arith.constant 0.000000e+00 : f32
    %99 = vector.broadcast %cst_39 : f32 to vector<8x32xf32>
    %100 = arith.maximumf %98, %99 : vector<8x32xf32>
    %cst_40 = arith.constant dense<0.000000e+00> : vector<1x8xf32>
    %101 = tpu.matmul %12, %100, %cst_40 {dimension_numbers = #tpu.dot_dimension_numbers<[1], [1], [0], [0], [0, 0, 1, 0], [], []>} : vector<1x32xf32>, vector<8x32xf32>, vector<1x8xf32> -> vector<1x8xf32>
    %102 = vector.broadcast %13 : vector<1x1xf32> to vector<1x8xf32>
    %103 = arith.addf %101, %102 : vector<1x8xf32>
    %c1_41 = arith.constant 1 : index
    %c0_42 = arith.constant 0 : index
    %c0_43 = arith.constant 0 : index
    %104 = vector.load %arg6[%c1_41, %c0_42, %c0_43] : memref<2x5x32xf32, #tpu.memory_space<vmem>>, vector<1x5x32xf32>
    %105 = vector.shape_cast %104 : vector<1x5x32xf32> to vector<5x32xf32>
    %106 = vector.extract_strided_slice %105 {offsets = [0, 0], sizes = [1, 32], strides = [1, 1]} : vector<5x32xf32> to vector<1x32xf32>
    %107 = vector.extract_strided_slice %105 {offsets = [1, 0], sizes = [1, 32], strides = [1, 1]} : vector<5x32xf32> to vector<1x32xf32>
    %108 = vector.extract_strided_slice %105 {offsets = [2, 0], sizes = [1, 32], strides = [1, 1]} : vector<5x32xf32> to vector<1x32xf32>
    %109 = vector.extract_strided_slice %105 {offsets = [3, 0], sizes = [1, 32], strides = [1, 1]} : vector<5x32xf32> to vector<1x32xf32>
    %110 = vector.extract_strided_slice %105 {offsets = [4, 0], sizes = [1, 1], strides = [1, 1]} : vector<5x32xf32> to vector<1x1xf32>
    %c1_44 = arith.constant 1 : index
    %c0_45 = arith.constant 0 : index
    %c0_46 = arith.constant 0 : index
    %111 = vector.load %arg3[%c1_44, %c0_45, %c0_46] : memref<2x16x32xf32, #tpu.memory_space<vmem>>, vector<1x16x32xf32>
    %112 = vector.shape_cast %111 : vector<1x16x32xf32> to vector<16x32xf32>
    %cst_47 = arith.constant dense<0.000000e+00> : vector<8x32xf32>
    %113 = tpu.matmul %0, %112, %cst_47 {dimension_numbers = #tpu.dot_dimension_numbers<[1], [0], [0], [1], [0, 0, 1, 1], [], []>} : vector<8x16xf32>, vector<16x32xf32>, vector<8x32xf32> -> vector<8x32xf32>
    %114 = vector.broadcast %106 : vector<1x32xf32> to vector<8x32xf32>
    %115 = arith.addf %113, %114 : vector<8x32xf32>
    %cst_48 = arith.constant dense<0.000000e+00> : vector<8xf32>
    %116 = vector.multi_reduction <add>, %115, %cst_48 [1] : vector<8x32xf32> to vector<8xf32>
    %117 = vector.shape_cast %116 : vector<8xf32> to vector<8x1xf32>
    %118 = arith.mulf %115, %115 : vector<8x32xf32>
    %cst_49 = arith.constant dense<0.000000e+00> : vector<8xf32>
    %119 = vector.multi_reduction <add>, %118, %cst_49 [1] : vector<8x32xf32> to vector<8xf32>
    %120 = vector.shape_cast %119 : vector<8xf32> to vector<8x1xf32>
    %cst_50 = arith.constant 3.125000e-02 : f32
    %121 = vector.broadcast %cst_50 : f32 to vector<8x1xf32>
    %122 = arith.mulf %117, %121 : vector<8x1xf32>
    %cst_51 = arith.constant 3.125000e-02 : f32
    %123 = vector.broadcast %cst_51 : f32 to vector<8x1xf32>
    %124 = arith.mulf %120, %123 : vector<8x1xf32>
    %125 = arith.mulf %122, %122 : vector<8x1xf32>
    %126 = arith.subf %124, %125 : vector<8x1xf32>
    %127 = vector.broadcast %122 : vector<8x1xf32> to vector<8x32xf32>
    %128 = arith.subf %115, %127 : vector<8x32xf32>
    %cst_52 = arith.constant 9.99999974E-6 : f32
    %129 = vector.broadcast %cst_52 : f32 to vector<8x1xf32>
    %130 = arith.addf %126, %129 : vector<8x1xf32>
    %131 = math.rsqrt %130 : vector<8x1xf32>
    %132 = vector.broadcast %131 : vector<8x1xf32> to vector<8x32xf32>
    %133 = arith.mulf %128, %132 : vector<8x32xf32>
    %134 = vector.broadcast %1 : vector<1x32xf32> to vector<8x32xf32>
    %135 = arith.mulf %133, %134 : vector<8x32xf32>
    %136 = vector.broadcast %2 : vector<1x32xf32> to vector<8x32xf32>
    %137 = arith.addf %135, %136 : vector<8x32xf32>
    %cst_53 = arith.constant 0.000000e+00 : f32
    %138 = vector.broadcast %cst_53 : f32 to vector<8x32xf32>
    %139 = arith.maximumf %137, %138 : vector<8x32xf32>
    %c1_54 = arith.constant 1 : index
    %c0_55 = arith.constant 0 : index
    %c0_56 = arith.constant 0 : index
    %140 = vector.load %arg4[%c1_54, %c0_55, %c0_56] : memref<2x32x32xf32, #tpu.memory_space<vmem>>, vector<1x32x32xf32>
    %141 = vector.shape_cast %140 : vector<1x32x32xf32> to vector<32x32xf32>
    %cst_57 = arith.constant dense<0.000000e+00> : vector<8x32xf32>
    %142 = tpu.matmul %139, %141, %cst_57 {dimension_numbers = #tpu.dot_dimension_numbers<[1], [0], [0], [1], [0, 0, 1, 1], [], []>} : vector<8x32xf32>, vector<32x32xf32>, vector<8x32xf32> -> vector<8x32xf32>
    %143 = vector.broadcast %107 : vector<1x32xf32> to vector<8x32xf32>
    %144 = arith.addf %142, %143 : vector<8x32xf32>
    %cst_58 = arith.constant dense<0.000000e+00> : vector<8xf32>
    %145 = vector.multi_reduction <add>, %144, %cst_58 [1] : vector<8x32xf32> to vector<8xf32>
    %146 = vector.shape_cast %145 : vector<8xf32> to vector<8x1xf32>
    %147 = arith.mulf %144, %144 : vector<8x32xf32>
    %cst_59 = arith.constant dense<0.000000e+00> : vector<8xf32>
    %148 = vector.multi_reduction <add>, %147, %cst_59 [1] : vector<8x32xf32> to vector<8xf32>
    %149 = vector.shape_cast %148 : vector<8xf32> to vector<8x1xf32>
    %cst_60 = arith.constant 3.125000e-02 : f32
    %150 = vector.broadcast %cst_60 : f32 to vector<8x1xf32>
    %151 = arith.mulf %146, %150 : vector<8x1xf32>
    %cst_61 = arith.constant 3.125000e-02 : f32
    %152 = vector.broadcast %cst_61 : f32 to vector<8x1xf32>
    %153 = arith.mulf %149, %152 : vector<8x1xf32>
    %154 = arith.mulf %151, %151 : vector<8x1xf32>
    %155 = arith.subf %153, %154 : vector<8x1xf32>
    %156 = vector.broadcast %151 : vector<8x1xf32> to vector<8x32xf32>
    %157 = arith.subf %144, %156 : vector<8x32xf32>
    %cst_62 = arith.constant 9.99999974E-6 : f32
    %158 = vector.broadcast %cst_62 : f32 to vector<8x1xf32>
    %159 = arith.addf %155, %158 : vector<8x1xf32>
    %160 = math.rsqrt %159 : vector<8x1xf32>
    %161 = vector.broadcast %160 : vector<8x1xf32> to vector<8x32xf32>
    %162 = arith.mulf %157, %161 : vector<8x32xf32>
    %163 = vector.broadcast %3 : vector<1x32xf32> to vector<8x32xf32>
    %164 = arith.mulf %162, %163 : vector<8x32xf32>
    %165 = vector.broadcast %4 : vector<1x32xf32> to vector<8x32xf32>
    %166 = arith.addf %164, %165 : vector<8x32xf32>
    %cst_63 = arith.constant 0.000000e+00 : f32
    %167 = vector.broadcast %cst_63 : f32 to vector<8x32xf32>
    %168 = arith.maximumf %166, %167 : vector<8x32xf32>
    %c1_64 = arith.constant 1 : index
    %c0_65 = arith.constant 0 : index
    %c0_66 = arith.constant 0 : index
    %169 = vector.load %arg5[%c1_64, %c0_65, %c0_66] : memref<2x32x32xf32, #tpu.memory_space<vmem>>, vector<1x32x32xf32>
    %170 = vector.shape_cast %169 : vector<1x32x32xf32> to vector<32x32xf32>
    %cst_67 = arith.constant dense<0.000000e+00> : vector<8x32xf32>
    %171 = tpu.matmul %168, %170, %cst_67 {dimension_numbers = #tpu.dot_dimension_numbers<[1], [0], [0], [1], [0, 0, 1, 1], [], []>} : vector<8x32xf32>, vector<32x32xf32>, vector<8x32xf32> -> vector<8x32xf32>
    %172 = vector.broadcast %108 : vector<1x32xf32> to vector<8x32xf32>
    %173 = arith.addf %171, %172 : vector<8x32xf32>
    %cst_68 = arith.constant dense<0.000000e+00> : vector<8xf32>
    %174 = vector.multi_reduction <add>, %173, %cst_68 [1] : vector<8x32xf32> to vector<8xf32>
    %175 = vector.shape_cast %174 : vector<8xf32> to vector<8x1xf32>
    %176 = arith.mulf %173, %173 : vector<8x32xf32>
    %cst_69 = arith.constant dense<0.000000e+00> : vector<8xf32>
    %177 = vector.multi_reduction <add>, %176, %cst_69 [1] : vector<8x32xf32> to vector<8xf32>
    %178 = vector.shape_cast %177 : vector<8xf32> to vector<8x1xf32>
    %cst_70 = arith.constant 3.125000e-02 : f32
    %179 = vector.broadcast %cst_70 : f32 to vector<8x1xf32>
    %180 = arith.mulf %175, %179 : vector<8x1xf32>
    %cst_71 = arith.constant 3.125000e-02 : f32
    %181 = vector.broadcast %cst_71 : f32 to vector<8x1xf32>
    %182 = arith.mulf %178, %181 : vector<8x1xf32>
    %183 = arith.mulf %180, %180 : vector<8x1xf32>
    %184 = arith.subf %182, %183 : vector<8x1xf32>
    %185 = vector.broadcast %180 : vector<8x1xf32> to vector<8x32xf32>
    %186 = arith.subf %173, %185 : vector<8x32xf32>
    %cst_72 = arith.constant 9.99999974E-6 : f32
    %187 = vector.broadcast %cst_72 : f32 to vector<8x1xf32>
    %188 = arith.addf %184, %187 : vector<8x1xf32>
    %189 = math.rsqrt %188 : vector<8x1xf32>
    %190 = vector.broadcast %189 : vector<8x1xf32> to vector<8x32xf32>
    %191 = arith.mulf %186, %190 : vector<8x32xf32>
    %192 = vector.broadcast %5 : vector<1x32xf32> to vector<8x32xf32>
    %193 = arith.mulf %191, %192 : vector<8x32xf32>
    %194 = vector.broadcast %6 : vector<1x32xf32> to vector<8x32xf32>
    %195 = arith.addf %193, %194 : vector<8x32xf32>
    %cst_73 = arith.constant 0.000000e+00 : f32
    %196 = vector.broadcast %cst_73 : f32 to vector<8x32xf32>
    %197 = arith.maximumf %195, %196 : vector<8x32xf32>
    %cst_74 = arith.constant dense<0.000000e+00> : vector<1x8xf32>
    %198 = tpu.matmul %109, %197, %cst_74 {dimension_numbers = #tpu.dot_dimension_numbers<[1], [1], [0], [0], [0, 0, 1, 0], [], []>} : vector<1x32xf32>, vector<8x32xf32>, vector<1x8xf32> -> vector<1x8xf32>
    %199 = vector.broadcast %110 : vector<1x1xf32> to vector<1x8xf32>
    %200 = arith.addf %198, %199 : vector<1x8xf32>
    %201 = tpu.concatenate %103, %200 in 0 : vector<1x8xf32>, vector<1x8xf32> -> vector<2x8xf32>
    %202 = vector.shape_cast %201 : vector<2x8xf32> to vector<1x2x8xf32>
    %c0_75 = arith.constant 0 : index
    %c0_76 = arith.constant 0 : index
    %c0_77 = arith.constant 0 : index
    %203 = vector.load %arg8[%c0_75, %c0_76, %c0_77] : memref<1x2x8xf32, #tpu.memory_space<vmem>>, vector<1x2x8xf32>
    tpu.vector_store %arg8[%c0_75, %c0_76, %c0_77], %202 {strides = array<i32>} : memref<1x2x8xf32, #tpu.memory_space<vmem>>, vector<1x2x8xf32>,
    return
  }
  func.func @transform_0(%arg0: i32, %arg1: i32) -> (i32, i32) {
    %c0_i32 = arith.constant 0 : i32
    %c0_i32_0 = arith.constant 0 : i32
    return %arg1, %c0_i32 : i32, i32
  }
  func.func @transform_1(%arg0: i32, %arg1: i32) -> (i32, i32, i32) {
    %c0_i32 = arith.constant 0 : i32
    %c0_i32_0 = arith.constant 0 : i32
    %c0_i32_1 = arith.constant 0 : i32
    return %arg0, %c0_i32, %c0_i32_0 : i32, i32, i32
  }
  func.func @transform_2(%arg0: i32, %arg1: i32) -> (i32, i32, i32) {
    %c0_i32 = arith.constant 0 : i32
    %c0_i32_0 = arith.constant 0 : i32
    %c0_i32_1 = arith.constant 0 : i32
    return %arg0, %c0_i32, %c0_i32_0 : i32, i32, i32
  }
  func.func @transform_3(%arg0: i32, %arg1: i32) -> (i32, i32, i32) {
    %c0_i32 = arith.constant 0 : i32
    %c0_i32_0 = arith.constant 0 : i32
    %c0_i32_1 = arith.constant 0 : i32
    return %arg0, %c0_i32, %c0_i32_0 : i32, i32, i32
  }
  func.func @transform_4(%arg0: i32, %arg1: i32) -> (i32, i32, i32) {
    %c0_i32 = arith.constant 0 : i32
    %c0_i32_0 = arith.constant 0 : i32
    %c0_i32_1 = arith.constant 0 : i32
    return %arg0, %c0_i32, %c0_i32_0 : i32, i32, i32
  }
  func.func @transform_5(%arg0: i32, %arg1: i32) -> (i32, i32) {
    %c0_i32 = arith.constant 0 : i32
    %c0_i32_0 = arith.constant 0 : i32
    %c0_i32_1 = arith.constant 0 : i32
    return %c0_i32, %c0_i32_0 : i32, i32
  }
  func.func @transform_6(%arg0: i32, %arg1: i32) -> (i32, i32, i32) {
    %c0_i32 = arith.constant 0 : i32
    %c0_i32_0 = arith.constant 0 : i32
    return %arg0, %c0_i32, %arg1 : i32, i32, i32
  }
}

</mosaic_0001>

<llo_original>
// kernel: tpu_custom_call.1
$region0: #{tpu_custom_call.1}
  #allocation0 [shape = 'u32[]', space=smem, size = 0x4, offset = 0x4, fixed_abs, tag = 'smem constant byte address 0x4 - core index']
  #allocation1 [shape = 'u32[72,128]{1,0:T(1,128)}', space=vmem, size = 0x9000, scoped, tag = 'internal scratch']
  %s0 = inlined_call_operand.vmem [shape: f32[8,16], index: 0, kind: input, shape index: {}]
  %s1 = inlined_call_operand.hbm [shape: f32[2,16,32], index: 1, kind: input, shape index: {}]
  %s2 = inlined_call_operand.hbm [shape: f32[2,32,32], index: 2, kind: input, shape index: {}]
  %s3 = inlined_call_operand.hbm [shape: f32[2,32,32], index: 3, kind: input, shape index: {}]
  %s4 = inlined_call_operand.vmem [shape: f32[2,5,32], index: 4, kind: input, shape index: {}]
  %s5 = inlined_call_operand.vmem [shape: f32[6,32], index: 5, kind: input, shape index: {}]
  %s6 = inlined_call_operand.hbm [shape: f32[1,2,8], index: 6, kind: output, shape index: {}]
  %s7 = sld [smem:[#allocation0]]
  $region46: #{tpu_custom_call.1} parent=0
    _
  %s9 = ssub.s32 1, %s7
  %s10 = scalar_select 0, %s9, %s7
  $region1: #{tpu_custom_call.1} parent=0
    #allocation2 [shape = 'u8[16384]{0}', space=vmem, size = 0x4000, scoped, tag = 'input window, operand 1, single buffered']
    #allocation3 [shape = 's32[1]{0}', space=sflag, size = 0x4, scoped, tag = 'scoped memory for tpu_custom_call.1']
    #allocation4 [shape = 's32[1]{0}', space=sflag, size = 0x4, scoped, tag = 'scoped memory for tpu_custom_call.1']
    #allocation5 [shape = 'u8[32768]{0}', space=vmem, size = 0x8000, scoped, tag = 'input window, operand 2, single buffered']
    #allocation6 [shape = 's32[1]{0}', space=sflag, size = 0x4, scoped, tag = 'scoped memory for tpu_custom_call.1']
    #allocation7 [shape = 'u8[32768]{0}', space=vmem, size = 0x8000, scoped, tag = 'input window, operand 3, single buffered']
    #allocation8 [shape = 'u8[1024]{0}', space=vmem, size = 0x400, scoped, tag = 'output window, operand 0, single buffered']
    %11 = vsyncpa [#allocation3], 0
    %12 = vsyncpa [#allocation6], 0
    %13 = vsyncpa [#allocation4], 0
    // Predicated region
    $region2: #{tpu_custom_call.1} parent=1 // pred_check
      _
    $region3: #{tpu_custom_call.1} parent=1 // pred_check_branch
      %15 = sbr.rel (0) target = $region5
    $region4: #{tpu_custom_call.1} parent=1 // pred_region
      _
    $region5: #{tpu_custom_call.1} parent=1 // pred_fallthru
      _
    // Predicated region
    $region6: #{tpu_custom_call.1} parent=1 // pred_check
      _
    $region7: #{tpu_custom_call.1} parent=1 // pred_check_branch
      %17 = sbr.rel (0) target = $region9
    $region8: #{tpu_custom_call.1} parent=1 // pred_region
      %19 = vsyncadd [#allocation3], 0
      %s20 = sshll.u32 %s1, 4
      %s21 = int_to_ptr.hbm [resolvable:$true] %s20
      %s22 = sshll.u32 [#allocation2], 4
      %s23 = int_to_ptr.vmem [resolvable:$true] %s22
      %28 = dma.hbm_to_vmem [thread:$0]  %s21, 512, %s23, [#allocation3], 128, 128, 8
    $region9: #{tpu_custom_call.1} parent=1 // pred_fallthru
      _
    // Predicated region
    $region10: #{tpu_custom_call.1} parent=1 // pred_check
      _
    $region11: #{tpu_custom_call.1} parent=1 // pred_check_branch
      %30 = sbr.rel (0) target = $region13
    $region12: #{tpu_custom_call.1} parent=1 // pred_region
      %32 = vsyncadd [#allocation6], 0
      %s33 = sshll.u32 %s2, 4
      %s34 = int_to_ptr.hbm [resolvable:$true] %s33
      %s35 = sshll.u32 [#allocation5], 4
      %s36 = int_to_ptr.vmem [resolvable:$true] %s35
      %41 = dma.hbm_to_vmem [thread:$0]  %s34, 1024, %s36, [#allocation6], 128, 128, 8
    $region13: #{tpu_custom_call.1} parent=1 // pred_fallthru
      _
    // Predicated region
    $region14: #{tpu_custom_call.1} parent=1 // pred_check
      _
    $region15: #{tpu_custom_call.1} parent=1 // pred_check_branch
      %43 = sbr.rel (0) target = $region17
    $region16: #{tpu_custom_call.1} parent=1 // pred_region
      %45 = vsyncadd [#allocation6], 0
      %s46 = sshll.u32 %s3, 4
      %s47 = int_to_ptr.hbm [resolvable:$true] %s46
      %s48 = sshll.u32 [#allocation7], 4
      %s49 = int_to_ptr.vmem [resolvable:$true] %s48
      %54 = dma.hbm_to_vmem [thread:$0]  %s47, 1024, %s49, [#allocation6], 128, 128, 8
    $region17: #{tpu_custom_call.1} parent=1 // pred_fallthru
      _
    // Predicated region
    $region18: #{tpu_custom_call.1} parent=1 // pred_check
      _
    $region19: #{tpu_custom_call.1} parent=1 // pred_check_branch
      %56 = sbr.rel (0) target = $region21
    $region20: #{tpu_custom_call.1} parent=1 // pred_region
      _
    $region21: #{tpu_custom_call.1} parent=1 // pred_fallthru
      _
    // Predicated region
    $region22: #{tpu_custom_call.1} parent=1 // pred_check
      _
    $region23: #{tpu_custom_call.1} parent=1 // pred_check_branch
      %58 = sbr.rel (0) target = $region25
    $region24: #{tpu_custom_call.1} parent=1 // pred_region
      _
    $region25: #{tpu_custom_call.1} parent=1 // pred_fallthru
      _
    // Predicated region
    $region26: #{tpu_custom_call.1} parent=1 // pred_check
      _
    $region27: #{tpu_custom_call.1} parent=1 // pred_check_branch
      %60 = sbr.rel (0) target = $region29
    $region28: #{tpu_custom_call.1} parent=1 // pred_region
      %62 = dma.done [#allocation3], 512
    $region29: #{tpu_custom_call.1} parent=1 // pred_fallthru
      _
    // Predicated region
    $region30: #{tpu_custom_call.1} parent=1 // pred_check
      _
    $region31: #{tpu_custom_call.1} parent=1 // pred_check_branch
      %64 = sbr.rel (0) target = $region33
    $region32: #{tpu_custom_call.1} parent=1 // pred_region
      %66 = dma.done [#allocation6], 1024
    $region33: #{tpu_custom_call.1} parent=1 // pred_fallthru
      _
    // Predicated region
    $region34: #{tpu_custom_call.1} parent=1 // pred_check
      _
    $region35: #{tpu_custom_call.1} parent=1 // pred_check_branch
      %68 = sbr.rel (0) target = $region37
    $region36: #{tpu_custom_call.1} parent=1 // pred_region
      %70 = dma.done [#allocation6], 1024
    $region37: #{tpu_custom_call.1} parent=1 // pred_fallthru
      _
    %v71 = vld [vmem:[%s0] sm:$0xff]
    %v72 = vld [vmem:[%s5] sm:$0x1]
    %v73 = vld [vmem:[%s5 + $0x1] sm:$0x1]
    %v74 = vld [vmem:[%s5 + $0x2] sm:$0x1]
    %v75 = vld [vmem:[%s5 + $0x3] sm:$0x1]
    %v76 = vld [vmem:[%s5 + $0x4] sm:$0x1]
    %v77 = vld [vmem:[%s5 + $0x5] sm:$0x1]
    %v78 = vld [vmem:[%s4] sm:$0x1f]
    %v79 = vld [vmem:[#allocation2] sm:$0xff]
    %v80 = vld [vmem:[#allocation2 + $0x8] sm:$0xff]
    %v81 = vperm.slane %v78, 0
    %vm82 = vcmask 130048
    %v84 = vsel %vm82, %v71, 0
    %86 = vmatpush.msra.mxu0 0.0
    %87 = vmatpush.msra.mxu0 0.0
    %88 = vmatpush.msra.mxu0 0.0
    %89 = vmatpush.msra.mxu0 0.0
    %90 = vmatpush.msra.mxu0 0.0
    %91 = vmatpush.msra.mxu0 0.0
    %92 = vmatpush.msra.mxu0 0.0
    %93 = vmatpush.msra.mxu0 0.0
    %94 = vmatpush.msra.mxu0 0.0
    %95 = vmatpush.msra.mxu0 0.0
    %96 = vmatpush.msra.mxu0 0.0
    %97 = vmatpush.msra.mxu0 0.0
    %98 = vmatpush.msra.mxu0 0.0
    %99 = vmatpush.msra.mxu0 0.0
    %100 = vmatpush.msra.mxu0 %v80
    %101 = vmatpush.msra.mxu0 %v79
    %102 = vmatmul.f32.gmra.mxu0 %v84
    %v103 = vpop.f32.mrf.mxu0
    %v104 = vadd.f32 %v81, %v103
    %105 = vdwg.mxu0
    %vm106 = vcmask 261120
    %v107 = vsel %vm106, %v104, 0.0
    %108 = vadd.xlane.f32.xlu0 %v107
    %v109 = vpop.xlane.xlu0 %108
    %v110 = vmul.f32 %v104, %v104
    %v111 = vsel %vm106, %v110, 0.0
    %112 = vadd.xlane.f32.xlu0 %v111
    %v113 = vpop.xlane.xlu0 %112
    %v114 = vmul.f32 %v109, 0.03125
    %v115 = vmul.f32 %v113, 0.03125
    %v116 = vmul.f32 %v114, %v114
    %v117 = vsub.f32 %v115, %v116
    %v118 = vsub.f32 %v104, %v114
    %v119 = vadd.f32 %v117, 1e-05
    %v120 = vrsqrt.pop %v119
    %v121 = vmul.f32 %v120, %v119
    %v122 = vmul.f32 %v121, %v120
    %v123 = vmul.f32 0.5, %v122
    %v124 = vsub.f32 1.5, %v123
    %v125 = vmul.f32 %v120, %v124
    %vm126 = vweird.f32 %v119
    %vm127 = vweird.f32 %v120
    %vm128 = vmor %vm126, %vm127
    %v129 = vsel %vm128, %v120, %v125
    %v130 = vmul.f32 %v118, %v129
    %v131 = vperm.slane %v72, 0
    %v132 = vmul.f32 %v130, %v131
    %v133 = vperm.slane %v73, 0
    %v134 = vadd.f32 %v132, %v133
    %v135 = vmax.f32 %v134, 0.0
    %v136 = vld [vmem:[#allocation5] sm:$0xff]
    %v137 = vld [vmem:[#allocation5 + $0x8] sm:$0xff]
    %v138 = vld [vmem:[#allocation5 + $0x10] sm:$0xff]
    %v139 = vld [vmem:[#allocation5 + $0x18] sm:$0xff]
    %v140 = vperm.slane %v78, 1
    %v142 = vsel %vm106, %v135, 0
    %144 = vmatpush.msra.mxu0 0.0
    %145 = vmatpush.msra.mxu0 0.0
    %146 = vmatpush.msra.mxu0 0.0
    %147 = vmatpush.msra.mxu0 0.0
    %148 = vmatpush.msra.mxu0 0.0
    %149 = vmatpush.msra.mxu0 0.0
    %150 = vmatpush.msra.mxu0 0.0
    %151 = vmatpush.msra.mxu0 0.0
    %152 = vmatpush.msra.mxu0 0.0
    %153 = vmatpush.msra.mxu0 0.0
    %154 = vmatpush.msra.mxu0 0.0
    %155 = vmatpush.msra.mxu0 0.0
    %156 = vmatpush.msra.mxu0 %v139
    %157 = vmatpush.msra.mxu0 %v138
    %158 = vmatpush.msra.mxu0 %v137
    %159 = vmatpush.msra.mxu0 %v136
    %160 = vmatmul.f32.gmra.mxu0 %v142
    %v161 = vpop.f32.mrf.mxu0
    %v162 = vadd.f32 %v140, %v161
    %163 = vdwg.mxu0
    %v164 = vsel %vm106, %v162, 0.0
    %165 = vadd.xlane.f32.xlu0 %v164
    %v166 = vpop.xlane.xlu0 %165
    %v167 = vmul.f32 %v162, %v162
    %v168 = vsel %vm106, %v167, 0.0
    %169 = vadd.xlane.f32.xlu0 %v168
    %v170 = vpop.xlane.xlu0 %169
    %v171 = vmul.f32 %v166, 0.03125
    %v172 = vmul.f32 %v170, 0.03125
    %v173 = vmul.f32 %v171, %v171
    %v174 = vsub.f32 %v172, %v173
    %v175 = vsub.f32 %v162, %v171
    %v176 = vadd.f32 %v174, 1e-05
    %v177 = vrsqrt.pop %v176
    %v178 = vmul.f32 %v177, %v176
    %v179 = vmul.f32 %v178, %v177
    %v180 = vmul.f32 0.5, %v179
    %v181 = vsub.f32 1.5, %v180
    %v182 = vmul.f32 %v177, %v181
    %vm183 = vweird.f32 %v176
    %vm184 = vweird.f32 %v177
    %vm185 = vmor %vm183, %vm184
    %v186 = vsel %vm185, %v177, %v182
    %v187 = vmul.f32 %v175, %v186
    %v188 = vperm.slane %v74, 0
    %v189 = vmul.f32 %v187, %v188
    %v190 = vperm.slane %v75, 0
    %v191 = vadd.f32 %v189, %v190
    %v192 = vmax.f32 %v191, 0.0
    %v193 = vld [vmem:[#allocation7] sm:$0xff]
    %v194 = vld [vmem:[#allocation7 + $0x8] sm:$0xff]
    %v195 = vld [vmem:[#allocation7 + $0x10] sm:$0xff]
    %v196 = vld [vmem:[#allocation7 + $0x18] sm:$0xff]
    %v197 = vperm.slane %v78, 2
    %v199 = vsel %vm106, %v192, 0
    %201 = vmatpush.msra.mxu0 0.0
    %202 = vmatpush.msra.mxu0 0.0
    %203 = vmatpush.msra.mxu0 0.0
    %204 = vmatpush.msra.mxu0 0.0
    %205 = vmatpush.msra.mxu0 0.0
    %206 = vmatpush.msra.mxu0 0.0
    %207 = vmatpush.msra.mxu0 0.0
    %208 = vmatpush.msra.mxu0 0.0
    %209 = vmatpush.msra.mxu0 0.0
    %210 = vmatpush.msra.mxu0 0.0
    %211 = vmatpush.msra.mxu0 0.0
    %212 = vmatpush.msra.mxu0 0.0
    %213 = vmatpush.msra.mxu0 %v196
    %214 = vmatpush.msra.mxu0 %v195
    %215 = vmatpush.msra.mxu0 %v194
    %216 = vmatpush.msra.mxu0 %v193
    %217 = vmatmul.f32.gmra.mxu0 %v199
    %v218 = vpop.f32.mrf.mxu0
    %v219 = vadd.f32 %v197, %v218
    %220 = vdwg.mxu0
    %v221 = vsel %vm106, %v219, 0.0
    %222 = vadd.xlane.f32.xlu0 %v221
    %v223 = vpop.xlane.xlu0 %222
    %v224 = vmul.f32 %v219, %v219
    %v225 = vsel %vm106, %v224, 0.0
    %226 = vadd.xlane.f32.xlu0 %v225
    %v227 = vpop.xlane.xlu0 %226
    %v228 = vmul.f32 %v223, 0.03125
    %v229 = vmul.f32 %v227, 0.03125
    %v230 = vmul.f32 %v228, %v228
    %v231 = vsub.f32 %v229, %v230
    %v232 = vsub.f32 %v219, %v228
    %v233 = vadd.f32 %v231, 1e-05
    %v234 = vrsqrt.pop %v233
    %v235 = vmul.f32 %v234, %v233
    %v236 = vmul.f32 %v235, %v234
    %v237 = vmul.f32 0.5, %v236
    %v238 = vsub.f32 1.5, %v237
    %v239 = vmul.f32 %v234, %v238
    %vm240 = vweird.f32 %v233
    %vm241 = vweird.f32 %v234
    %vm242 = vmor %vm240, %vm241
    %v243 = vsel %vm242, %v234, %v239
    %v244 = vmul.f32 %v232, %v243
    %v245 = vperm.slane %v76, 0
    %v246 = vmul.f32 %v244, %v245
    %v247 = vperm.slane %v77, 0
    %v248 = vadd.f32 %v246, %v247
    %v249 = vmax.f32 %v248, 0.0
    %251 = vset.pattern.permute.xlu0 0
    %252 = vperm.xlu0 %251, %v78
    %v253 = vpop.permute.xlu0 %252
    %v254 = vrot.slane %v78, 3
    %v255 = vrot.slane %v253, 4
    %v257 = vsel %vm106, %v254, 0
    %v260 = vsel %vm106, %v249, 0
    %262 = vmatpush.xpose.msra.mxu0 0.0
    %263 = vmatpush.xpose.msra.mxu0 0.0
    %264 = vmatpush.xpose.msra.mxu0 0.0
    %265 = vmatpush.xpose.msra.mxu0 0.0
    %266 = vmatpush.xpose.msra.mxu0 0.0
    %267 = vmatpush.xpose.msra.mxu0 0.0
    %268 = vmatpush.xpose.msra.mxu0 0.0
    %269 = vmatpush.xpose.msra.mxu0 0.0
    %270 = vmatpush.xpose.msra.mxu0 0.0
    %271 = vmatpush.xpose.msra.mxu0 0.0
    %272 = vmatpush.xpose.msra.mxu0 0.0
    %273 = vmatpush.xpose.msra.mxu0 0.0
    %274 = vmatpush.xpose.msra.mxu0 0.0
    %275 = vmatpush.xpose.msra.mxu0 0.0
    %276 = vmatpush.xpose.msra.mxu0 0.0
    %277 = vmatpush.xpose.msra.mxu0 %v260
    %278 = vmatmul.f32.gmra.mxu0 %v257
    %v279 = vpop.f32.mrf.mxu0
    %v280 = vadd.f32 %v255, %v279
    %281 = vdwg.mxu0
    %s282 = scalar_lea.vmem %s4, 8
    %v283 = vld [vmem:[%s282] sm:$0x1f]
    %s284 = scalar_lea.vmem [#allocation2], 16
    %v285 = vld [vmem:[%s284] sm:$0xff]
    %v286 = vld [vmem:[%s284 + $0x8] sm:$0xff]
    %v287 = vperm.slane %v283, 0
    %288 = vmatpush.msra.mxu0 0.0
    %289 = vmatpush.msra.mxu0 0.0
    %290 = vmatpush.msra.mxu0 0.0
    %291 = vmatpush.msra.mxu0 0.0
    %292 = vmatpush.msra.mxu0 0.0
    %293 = vmatpush.msra.mxu0 0.0
    %294 = vmatpush.msra.mxu0 0.0
    %295 = vmatpush.msra.mxu0 0.0
    %296 = vmatpush.msra.mxu0 0.0
    %297 = vmatpush.msra.mxu0 0.0
    %298 = vmatpush.msra.mxu0 0.0
    %299 = vmatpush.msra.mxu0 0.0
    %300 = vmatpush.msra.mxu0 0.0
    %301 = vmatpush.msra.mxu0 0.0
    %302 = vmatpush.msra.mxu0 %v286
    %303 = vmatpush.msra.mxu0 %v285
    %304 = vmatmul.f32.gmra.mxu0 %v84
    %v305 = vpop.f32.mrf.mxu0
    %v306 = vadd.f32 %v287, %v305
    %307 = vdwg.mxu0
    %v308 = vsel %vm106, %v306, 0.0
    %309 = vadd.xlane.f32.xlu0 %v308
    %v310 = vpop.xlane.xlu0 %309
    %v311 = vmul.f32 %v306, %v306
    %v312 = vsel %vm106, %v311, 0.0
    %313 = vadd.xlane.f32.xlu0 %v312
    %v314 = vpop.xlane.xlu0 %313
    %v315 = vmul.f32 %v310, 0.03125
    %v316 = vmul.f32 %v314, 0.03125
    %v317 = vmul.f32 %v315, %v315
    %v318 = vsub.f32 %v316, %v317
    %v319 = vsub.f32 %v306, %v315
    %v320 = vadd.f32 %v318, 1e-05
    %v321 = vrsqrt.pop %v320
    %v322 = vmul.f32 %v321, %v320
    %v323 = vmul.f32 %v322, %v321
    %v324 = vmul.f32 0.5, %v323
    %v325 = vsub.f32 1.5, %v324
    %v326 = vmul.f32 %v321, %v325
    %vm327 = vweird.f32 %v320
    %vm328 = vweird.f32 %v321
    %vm329 = vmor %vm327, %vm328
    %v330 = vsel %vm329, %v321, %v326
    %v331 = vmul.f32 %v319, %v330
    %v332 = vmul.f32 %v331, %v131
    %v333 = vadd.f32 %v332, %v133
    %v334 = vmax.f32 %v333, 0.0
    %s335 = scalar_lea.vmem [#allocation5], 32
    %v336 = vld [vmem:[%s335] sm:$0xff]
    %v337 = vld [vmem:[%s335 + $0x8] sm:$0xff]
    %v338 = vld [vmem:[%s335 + $0x10] sm:$0xff]
    %v339 = vld [vmem:[%s335 + $0x18] sm:$0xff]
    %v340 = vperm.slane %v283, 1
    %v342 = vsel %vm106, %v334, 0
    %344 = vmatpush.msra.mxu0 0.0
    %345 = vmatpush.msra.mxu0 0.0
    %346 = vmatpush.msra.mxu0 0.0
    %347 = vmatpush.msra.mxu0 0.0
    %348 = vmatpush.msra.mxu0 0.0
    %349 = vmatpush.msra.mxu0 0.0
    %350 = vmatpush.msra.mxu0 0.0
    %351 = vmatpush.msra.mxu0 0.0
    %352 = vmatpush.msra.mxu0 0.0
    %353 = vmatpush.msra.mxu0 0.0
    %354 = vmatpush.msra.mxu0 0.0
    %355 = vmatpush.msra.mxu0 0.0
    %356 = vmatpush.msra.mxu0 %v339
    %357 = vmatpush.msra.mxu0 %v338
    %358 = vmatpush.msra.mxu0 %v337
    %359 = vmatpush.msra.mxu0 %v336
    %360 = vmatmul.f32.gmra.mxu0 %v342
    %v361 = vpop.f32.mrf.mxu0
    %v362 = vadd.f32 %v340, %v361
    %363 = vdwg.mxu0
    %v364 = vsel %vm106, %v362, 0.0
    %365 = vadd.xlane.f32.xlu0 %v364
    %v366 = vpop.xlane.xlu0 %365
    %v367 = vmul.f32 %v362, %v362
    %v368 = vsel %vm106, %v367, 0.0
    %369 = vadd.xlane.f32.xlu0 %v368
    %v370 = vpop.xlane.xlu0 %369
    %v371 = vmul.f32 %v366, 0.03125
    %v372 = vmul.f32 %v370, 0.03125
    %v373 = vmul.f32 %v371, %v371
    %v374 = vsub.f32 %v372, %v373
    %v375 = vsub.f32 %v362, %v371
    %v376 = vadd.f32 %v374, 1e-05
    %v377 = vrsqrt.pop %v376
    %v378 = vmul.f32 %v377, %v376
    %v379 = vmul.f32 %v378, %v377
    %v380 = vmul.f32 0.5, %v379
    %v381 = vsub.f32 1.5, %v380
    %v382 = vmul.f32 %v377, %v381
    %vm383 = vweird.f32 %v376
    %vm384 = vweird.f32 %v377
    %vm385 = vmor %vm383, %vm384
    %v386 = vsel %vm385, %v377, %v382
    %v387 = vmul.f32 %v375, %v386
    %v388 = vmul.f32 %v387, %v188
    %v389 = vadd.f32 %v388, %v190
    %v390 = vmax.f32 %v389, 0.0
    %s391 = scalar_lea.vmem [#allocation7], 32
    %v392 = vld [vmem:[%s391] sm:$0xff]
    %v393 = vld [vmem:[%s391 + $0x8] sm:$0xff]
    %v394 = vld [vmem:[%s391 + $0x10] sm:$0xff]
    %v395 = vld [vmem:[%s391 + $0x18] sm:$0xff]
    %v396 = vperm.slane %v283, 2
    %v398 = vsel %vm106, %v390, 0
    %400 = vmatpush.msra.mxu0 0.0
    %401 = vmatpush.msra.mxu0 0.0
    %402 = vmatpush.msra.mxu0 0.0
    %403 = vmatpush.msra.mxu0 0.0
    %404 = vmatpush.msra.mxu0 0.0
    %405 = vmatpush.msra.mxu0 0.0
    %406 = vmatpush.msra.mxu0 0.0
    %407 = vmatpush.msra.mxu0 0.0
    %408 = vmatpush.msra.mxu0 0.0
    %409 = vmatpush.msra.mxu0 0.0
    %410 = vmatpush.msra.mxu0 0.0
    %411 = vmatpush.msra.mxu0 0.0
    %412 = vmatpush.msra.mxu0 %v395
    %413 = vmatpush.msra.mxu0 %v394
    %414 = vmatpush.msra.mxu0 %v393
    %415 = vmatpush.msra.mxu0 %v392
    %416 = vmatmul.f32.gmra.mxu0 %v398
    %v417 = vpop.f32.mrf.mxu0
    %v418 = vadd.f32 %v396, %v417
    %419 = vdwg.mxu0
    %v420 = vsel %vm106, %v418, 0.0
    %421 = vadd.xlane.f32.xlu0 %v420
    %v422 = vpop.xlane.xlu0 %421
    %v423 = vmul.f32 %v418, %v418
    %v424 = vsel %vm106, %v423, 0.0
    %425 = vadd.xlane.f32.xlu0 %v424
    %v426 = vpop.xlane.xlu0 %425
    %v427 = vmul.f32 %v422, 0.03125
    %v428 = vmul.f32 %v426, 0.03125
    %v429 = vmul.f32 %v427, %v427
    %v430 = vsub.f32 %v428, %v429
    %v431 = vsub.f32 %v418, %v427
    %v432 = vadd.f32 %v430, 1e-05
    %v433 = vrsqrt.pop %v432
    %v434 = vmul.f32 %v433, %v432
    %v435 = vmul.f32 %v434, %v433
    %v436 = vmul.f32 0.5, %v435
    %v437 = vsub.f32 1.5, %v436
    %v438 = vmul.f32 %v433, %v437
    %vm439 = vweird.f32 %v432
    %vm440 = vweird.f32 %v433
    %vm441 = vmor %vm439, %vm440
    %v442 = vsel %vm441, %v433, %v438
    %v443 = vmul.f32 %v431, %v442
    %v444 = vmul.f32 %v443, %v245
    %v445 = vadd.f32 %v444, %v247
    %v446 = vmax.f32 %v445, 0.0
    %448 = vset.pattern.permute.xlu0 0
    %449 = vperm.xlu0 %448, %v283
    %v450 = vpop.permute.xlu0 %449
    %v451 = vrot.slane %v283, 3
    %v452 = vrot.slane %v450, 4
    %v454 = vsel %vm106, %v451, 0
    %v457 = vsel %vm106, %v446, 0
    %459 = vmatpush.xpose.msra.mxu0 0.0
    %460 = vmatpush.xpose.msra.mxu0 0.0
    %461 = vmatpush.xpose.msra.mxu0 0.0
    %462 = vmatpush.xpose.msra.mxu0 0.0
    %463 = vmatpush.xpose.msra.mxu0 0.0
    %464 = vmatpush.xpose.msra.mxu0 0.0
    %465 = vmatpush.xpose.msra.mxu0 0.0
    %466 = vmatpush.xpose.msra.mxu0 0.0
    %467 = vmatpush.xpose.msra.mxu0 0.0
    %468 = vmatpush.xpose.msra.mxu0 0.0
    %469 = vmatpush.xpose.msra.mxu0 0.0
    %470 = vmatpush.xpose.msra.mxu0 0.0
    %471 = vmatpush.xpose.msra.mxu0 0.0
    %472 = vmatpush.xpose.msra.mxu0 0.0
    %473 = vmatpush.xpose.msra.mxu0 0.0
    %474 = vmatpush.xpose.msra.mxu0 %v457
    %475 = vmatmul.f32.gmra.mxu0 %v454
    %v476 = vpop.f32.mrf.mxu0
    %v477 = vadd.f32 %v452, %v476
    %478 = vdwg.mxu0
    %v480 = vrot.slane %v477, 7
    %vm482 = vcmask 1040384
    %v483 = vsel %vm482, %v280, %v480
    %vm484 = vcmask 58368
    %485 = vst.msk [vmem:[#allocation8] sm:$0x3] %vm484, %v483
    // Predicated region
    $region38: #{tpu_custom_call.1} parent=1 // pred_check
      _
    $region39: #{tpu_custom_call.1} parent=1 // pred_check_branch
      %487 = sbr.rel (0) target = $region41
    $region40: #{tpu_custom_call.1} parent=1 // pred_region
      %489 = vsyncadd [#allocation4], 0
      %s491 = sshll.u32 [#allocation8], 4
      %s492 = int_to_ptr.vmem [resolvable:$true] %s491
      %s493 = sshll.u32 %s6, 4
      %s494 = int_to_ptr.hbm [resolvable:$true] %s493
      %496 = dma.vmem_to_hbm [thread:$0]  %s492, 32, %s494, [#allocation4]
    $region41: #{tpu_custom_call.1} parent=1 // pred_fallthru
      _
    // Predicated region
    $region42: #{tpu_custom_call.1} parent=1 // pred_check
      _
    $region43: #{tpu_custom_call.1} parent=1 // pred_check_branch
      %498 = sbr.rel (0) target = $region45
    $region44: #{tpu_custom_call.1} parent=1 // pred_region
      %500 = dma.done [#allocation4], 32
    $region45: #{tpu_custom_call.1} parent=1 // pred_fallthru
      _
    %501 = vsyncpa [#allocation3], 1
    %502 = vsyncpa [#allocation6], 1
    %503 = vsyncpa [#allocation4], 1

</llo_original>
